<compile_context>
chip_gen: v7x
topology: tpu7x:2x2x1
jax: 0.10.0
libtpu: 0.0.40
codegen_flags: <defaults>
</compile_context>

<pallas_src>
import functools
import math

import jax
import jax.numpy as jnp
from jax.experimental import pallas as pl
from jax.experimental.pallas import tpu as pltpu


def _round_up(x, m):
    return ((x + m - 1) // m) * m


def _ff_relu_kernel(num_layers, x_ref, w_ref, b_ref, out_ref):
    """Fused MLP forward on one batch tile.

    x_ref:   [TB, D]       compute dtype (bf16)
    w_ref:   [L, D, D]     compute dtype (bf16), zero-padded, resident across grid steps
    b_ref:   [L, 1, D]     f32, zero-padded
    out_ref: [TB, D]       f32 (lane-dense; wrapper slices the valid columns)
    """
    h = x_ref[...]                      # [TB, D] bf16
    compute_dtype = h.dtype
    acc = None
    for i in range(num_layers):         # static unrolled loop over layers
        acc = jnp.dot(h, w_ref[i], preferred_element_type=jnp.float32) + b_ref[i]
        if i != num_layers - 1:
            # ReLU on hidden layers only; keep elementwise work in f32, feed MXU bf16.
            h = jnp.maximum(acc, 0.0).astype(compute_dtype)
    out_ref[...] = acc.astype(out_ref.dtype)


def ff_relu_net(x, weights, biases, *, block_batch=128, compute_dtype=jnp.bfloat16):
    """Run the fused MLP kernel.

    Args:
      x:        [batch, shape[0]] f32 input.
      weights:  list of [in_i, out_i] f32 arrays (transpose of nn.Linear.weight).
      biases:   list of [out_i] f32 arrays.
    Returns:
      [batch, shape[-1]] f32 output (no activation on the final layer).
    """
    num_layers = len(weights)
    batch, in_dim = x.shape
    out_dim = weights[-1].shape[1]

    # Common lane-dense padded width (multiple of 128) for every layer.
    dims = [w.shape[0] for w in weights] + [out_dim]
    d_pad = max(_round_up(d, 128) for d in dims)

    # Batch tile: multiple of 8 sublanes, capped by the (padded) batch.
    tb = max(8, min(_round_up(block_batch, 8), _round_up(batch, 8)))
    pb = _round_up(batch, tb)

    # ---- Pack + pad operands once on the host side (zero padding is exact). ----
    x_p = jnp.zeros((pb, d_pad), compute_dtype).at[:batch, :in_dim].set(
        x.astype(compute_dtype))
    w_p = jnp.zeros((num_layers, d_pad, d_pad), compute_dtype)
    b_p = jnp.zeros((num_layers, 1, d_pad), jnp.float32)
    for i, (w, b) in enumerate(zip(weights, biases)):
        w_p = w_p.at[i, : w.shape[0], : w.shape[1]].set(w.astype(compute_dtype))
        b_p = b_p.at[i, 0, : b.shape[-1]].set(b.reshape(-1).astype(jnp.float32))

    grid = (pb // tb,)

    flops = 2 * pb * num_layers * d_pad * d_pad
    bytes_accessed = (
        x_p.size * x_p.dtype.itemsize
        + w_p.size * w_p.dtype.itemsize
        + b_p.size * b_p.dtype.itemsize
        + pb * d_pad * 4
    )

    out = pl.pallas_call(
        functools.partial(_ff_relu_kernel, num_layers),
        out_shape=jax.ShapeDtypeStruct((pb, d_pad), jnp.float32),
        grid=grid,
        in_specs=[
            pl.BlockSpec((tb, d_pad), lambda i: (i, 0)),                      # x tile
            pl.BlockSpec((num_layers, d_pad, d_pad), lambda i: (0, 0, 0)),    # weights (resident)
            pl.BlockSpec((num_layers, 1, d_pad), lambda i: (0, 0, 0)),        # biases (resident)
        ],
        out_specs=pl.BlockSpec((tb, d_pad), lambda i: (i, 0)),
        compiler_params=pltpu.CompilerParams(
            dimension_semantics=("parallel",),    # batch tiles are independent (v7x: 2 TCs)
        ),
        cost_estimate=pl.CostEstimate(
            flops=flops, transcendentals=0, bytes_accessed=bytes_accessed),
    )(x_p, w_p, b_p)

    # Slice off batch / lane padding.
    return out[:batch, :out_dim]


def init_params(key, shape):
    """Deterministic init matching nn.Linear's default (uniform(-1/sqrt(fan_in), +))."""
    weights, biases = [], []
    for i in range(len(shape) - 1):
        fan_in, fan_out = shape[i], shape[i + 1]
        key, wk, bk = jax.random.split(key, 3)
        bound = 1.0 / math.sqrt(fan_in)
        # Stored as [in, out] so the kernel can do h @ W directly.
        w = jax.random.uniform(wk, (fan_in, fan_out), jnp.float32, -bound, bound)
        b = jax.random.uniform(bk, (fan_out,), jnp.float32, -bound, bound)
        weights.append(w)
        biases.append(b)
    return weights, biases


def reference_forward(x, weights, biases, compute_dtype=jnp.bfloat16):
    """Pure-JAX reference with the same bf16-matmul / f32-accumulate recipe as the kernel."""
    h = x.astype(compute_dtype)
    for i, (w, b) in enumerate(zip(weights, biases)):
        h = jnp.dot(h, w.astype(compute_dtype), preferred_element_type=jnp.float32) + b
        if i != len(weights) - 1:
            h = jnp.maximum(h, 0.0).astype(compute_dtype)
    return h


if __name__ == "__main__":
    # Network layer shapes (includes input and output dims).
    net_shape = [32, 64, 48, 16]
    batch = 256          # several batch tiles so the grid actually pipelines
    block_batch = 128    # rows per grid step (multiple of 8; >=128 MXU rows)

    key = jax.random.PRNGKey(0)
    key, xk = jax.random.split(key)
    x = jax.random.normal(xk, (batch, net_shape[0]), dtype=jnp.float32)

    weights, biases = init_params(key, net_shape)

    out = ff_relu_net(x, weights, biases, block_batch=block_batch)
    out = jax.block_until_ready(out)

    # Sanity check vs pure-JAX reference (same bf16/f32 mixed-precision recipe).
    ref = reference_forward(x, weights, biases)
    assert out.shape == (batch, net_shape[-1])
    assert jnp.allclose(out, ref, atol=2e-2, rtol=2e-2), "mismatch vs reference"

    print("KERNEL_OK")
</pallas_src>

<mosaic_0001>
module attributes {stable_mosaic.version = 11 : i64} {
  func.func @_ff_relu_kernel(%arg0: i32, %arg1: memref<128x128xbf16, #tpu.memory_space<vmem>>, %arg2: memref<3x128x128xbf16, #tpu.memory_space<vmem>>, %arg3: memref<3x1x128xf32, #tpu.memory_space<vmem>>, %arg4: memref<128x128xf32, #tpu.memory_space<vmem>>) attributes {dimension_semantics = [#tpu.dimension_semantics<parallel>], iteration_bounds = array<i64: 2>, scalar_prefetch = 0 : i64, scratch_operands = 0 : i64, tpu.core_type = #tpu.core_type<tc>, window_params = [{transform_indices = @transform_0, window_bounds = array<i64: 128, 128>}, {pipeline_mode = #tpu.pipeline_mode<synchronous>, transform_indices = @transform_1, window_bounds = array<i64: 3, 128, 128>}, {pipeline_mode = #tpu.pipeline_mode<synchronous>, transform_indices = @transform_2, window_bounds = array<i64: 3, 1, 128>}, {transform_indices = @transform_3, window_bounds = array<i64: 128, 128>}]} {
    %c0 = arith.constant 0 : index
    %c0_0 = arith.constant 0 : index
    %0 = vector.load %arg1[%c0, %c0_0] : memref<128x128xbf16, #tpu.memory_space<vmem>>, vector<128x128xbf16>
    %c0_1 = arith.constant 0 : index
    %c0_2 = arith.constant 0 : index
    %c0_3 = arith.constant 0 : index
    %1 = vector.load %arg2[%c0_1, %c0_2, %c0_3] : memref<3x128x128xbf16, #tpu.memory_space<vmem>>, vector<1x128x128xbf16>
    %2 = vector.shape_cast %1 : vector<1x128x128xbf16> to vector<128x128xbf16>
    %cst = arith.constant dense<0.000000e+00> : vector<128x128xf32>
    %3 = tpu.matmul %0, %2, %cst {dimension_numbers = #tpu.dot_dimension_numbers<[1], [0], [0], [1], [0, 0, 1, 1], [], []>} : vector<128x128xbf16>, vector<128x128xbf16>, vector<128x128xf32> -> vector<128x128xf32>
    %c0_4 = arith.constant 0 : index
    %c0_5 = arith.constant 0 : index
    %c0_6 = arith.constant 0 : index
    %4 = vector.load %arg3[%c0_4, %c0_5, %c0_6] : memref<3x1x128xf32, #tpu.memory_space<vmem>>, vector<1x1x128xf32>
    %5 = vector.shape_cast %4 : vector<1x1x128xf32> to vector<1x128xf32>
    %6 = vector.broadcast %5 : vector<1x128xf32> to vector<128x128xf32>
    %7 = arith.addf %3, %6 : vector<128x128xf32>
    %cst_7 = arith.constant 0.000000e+00 : f32
    %8 = vector.broadcast %cst_7 : f32 to vector<128x128xf32>
    %9 = arith.maximumf %7, %8 : vector<128x128xf32>
    %10 = arith.truncf %9 : vector<128x128xf32> to vector<128x128xbf16>
    %c1 = arith.constant 1 : index
    %c0_8 = arith.constant 0 : index
    %c0_9 = arith.constant 0 : index
    %11 = vector.load %arg2[%c1, %c0_8, %c0_9] : memref<3x128x128xbf16, #tpu.memory_space<vmem>>, vector<1x128x128xbf16>
    %12 = vector.shape_cast %11 : vector<1x128x128xbf16> to vector<128x128xbf16>
    %cst_10 = arith.constant dense<0.000000e+00> : vector<128x128xf32>
    %13 = tpu.matmul %10, %12, %cst_10 {dimension_numbers = #tpu.dot_dimension_numbers<[1], [0], [0], [1], [0, 0, 1, 1], [], []>} : vector<128x128xbf16>, vector<128x128xbf16>, vector<128x128xf32> -> vector<128x128xf32>
    %c1_11 = arith.constant 1 : index
    %c0_12 = arith.constant 0 : index
    %c0_13 = arith.constant 0 : index
    %14 = vector.load %arg3[%c1_11, %c0_12, %c0_13] : memref<3x1x128xf32, #tpu.memory_space<vmem>>, vector<1x1x128xf32>
    %15 = vector.shape_cast %14 : vector<1x1x128xf32> to vector<1x128xf32>
    %16 = vector.broadcast %15 : vector<1x128xf32> to vector<128x128xf32>
    %17 = arith.addf %13, %16 : vector<128x128xf32>
    %cst_14 = arith.constant 0.000000e+00 : f32
    %18 = vector.broadcast %cst_14 : f32 to vector<128x128xf32>
    %19 = arith.maximumf %17, %18 : vector<128x128xf32>
    %20 = arith.truncf %19 : vector<128x128xf32> to vector<128x128xbf16>
    %c2 = arith.constant 2 : index
    %c0_15 = arith.constant 0 : index
    %c0_16 = arith.constant 0 : index
    %21 = vector.load %arg2[%c2, %c0_15, %c0_16] : memref<3x128x128xbf16, #tpu.memory_space<vmem>>, vector<1x128x128xbf16>
    %22 = vector.shape_cast %21 : vector<1x128x128xbf16> to vector<128x128xbf16>
    %cst_17 = arith.constant dense<0.000000e+00> : vector<128x128xf32>
    %23 = tpu.matmul %20, %22, %cst_17 {dimension_numbers = #tpu.dot_dimension_numbers<[1], [0], [0], [1], [0, 0, 1, 1], [], []>} : vector<128x128xbf16>, vector<128x128xbf16>, vector<128x128xf32> -> vector<128x128xf32>
    %c2_18 = arith.constant 2 : index
    %c0_19 = arith.constant 0 : index
    %c0_20 = arith.constant 0 : index
    %24 = vector.load %arg3[%c2_18, %c0_19, %c0_20] : memref<3x1x128xf32, #tpu.memory_space<vmem>>, vector<1x1x128xf32>
    %25 = vector.shape_cast %24 : vector<1x1x128xf32> to vector<1x128xf32>
    %26 = vector.broadcast %25 : vector<1x128xf32> to vector<128x128xf32>
    %27 = arith.addf %23, %26 : vector<128x128xf32>
    %c0_21 = arith.constant 0 : index
    %c0_22 = arith.constant 0 : index
    %28 = vector.load %arg4[%c0_21, %c0_22] : memref<128x128xf32, #tpu.memory_space<vmem>>, vector<128x128xf32>
    tpu.vector_store %arg4[%c0_21, %c0_22], %27 {strides = array<i32>} : memref<128x128xf32, #tpu.memory_space<vmem>>, vector<128x128xf32>,
    return
  }
  func.func @transform_0(%arg0: i32) -> (i32, i32) {
    %c0_i32 = arith.constant 0 : i32
    %c0_i32_0 = arith.constant 0 : i32
    return %arg0, %c0_i32 : i32, i32
  }
  func.func @transform_1(%arg0: i32) -> (i32, i32, i32) {
    %c0_i32 = arith.constant 0 : i32
    %c0_i32_0 = arith.constant 0 : i32
    %c0_i32_1 = arith.constant 0 : i32
    %c0_i32_2 = arith.constant 0 : i32
    return %c0_i32, %c0_i32_0, %c0_i32_1 : i32, i32, i32
  }
  func.func @transform_2(%arg0: i32) -> (i32, i32, i32) {
    %c0_i32 = arith.constant 0 : i32
    %c0_i32_0 = arith.constant 0 : i32
    %c0_i32_1 = arith.constant 0 : i32
    %c0_i32_2 = arith.constant 0 : i32
    return %c0_i32, %c0_i32_0, %c0_i32_1 : i32, i32, i32
  }
  func.func @transform_3(%arg0: i32) -> (i32, i32) {
    %c0_i32 = arith.constant 0 : i32
    %c0_i32_0 = arith.constant 0 : i32
    return %arg0, %c0_i32 : i32, i32
  }
}

</mosaic_0001>

<llo_original>
// kernel: tpu_custom_call.1
$region0: #{tpu_custom_call.1}
  #allocation0 [shape = 'u32[]', space=smem, size = 0x4, offset = 0x4, fixed_abs, tag = 'smem constant byte address 0x4 - core index']
  #allocation1 [shape = 'u32[144,128]{1,0:T(1,128)}', space=vmem, size = 0x12000, scoped, tag = 'internal scratch']
  %s0 = inlined_call_operand.hbm [shape: bf16[256,128], index: 0, kind: input, shape index: {}]
  %s1 = inlined_call_operand.hbm [shape: bf16[3,128,128], index: 1, kind: input, shape index: {}]
  %s2 = inlined_call_operand.vmem [shape: f32[3,1,128], index: 2, kind: input, shape index: {}]
  %s3 = inlined_call_operand.hbm [shape: f32[256,128], index: 3, kind: output, shape index: {}]
  %s4 = sld [smem:[#allocation0]]
  $region53: #{tpu_custom_call.1} parent=0
    _
  %s6 = ssub.s32 1, %s4
  %s7 = scalar_select 0, %s6, %s4
  $region1: #{tpu_custom_call.1} parent=0
    #allocation2 [shape = 'u8[65536]{0}', space=vmem, size = 0x10000, scoped, tag = 'input window, operand 0']
    #allocation3 [shape = 's32[2]{0}', space=sflag, size = 0x8, scoped, tag = 'scoped memory for tpu_custom_call.1']
    #allocation4 [shape = 's32[2]{0}', space=sflag, size = 0x8, scoped, tag = 'scoped memory for tpu_custom_call.1']
    #allocation5 [shape = 'u8[98304]{0}', space=vmem, size = 0x18000, scoped, tag = 'input window, operand 1, single buffered']
    #allocation6 [shape = 's32[1]{0}', space=sflag, size = 0x4, scoped, tag = 'scoped memory for tpu_custom_call.1']
    #allocation7 [shape = 'u8[131072]{0}', space=vmem, size = 0x20000, scoped, tag = 'output window, operand 0']
    %8 = vsyncpa [#allocation3], 0
    %s9 = scalar_lea.sflag [#allocation3], 1
    %10 = vsyncpa %s9, 0
    %11 = vsyncpa [#allocation6], 0
    %12 = vsyncpa [#allocation4], 0
    %s13 = scalar_lea.sflag [#allocation4], 1
    %14 = vsyncpa %s13, 0
    loop: start=0, step=1, limit=4
    $region2: #{tpu_custom_call.1} parent=1 // loop_pre_header
      _
    $region3: #{tpu_custom_call.1} parent=1 // loop_header
      %s16 = sphi 0, %s20
      %p17 = scmp.ge.s32.totalorder %s16, 4
      %s26 = sphi 0, %s28
      %s29 = sphi 0, %s26
      %s30 = sphi 0, %s29
      %s46 = sphi 0, %s30
      %s50 = sphi 0, %s50
      %s52 = sphi 0, %s50
      %s53 = sphi 0, %s52
      %s67 = sphi 0, %s53
      %s71 = sphi 0, %s71
      %s73 = sphi 0, %s71
      %s74 = sphi 0, %s73
      %s88 = sphi 0, %s74
      %s94 = sphi 0, %s96
      %s97 = sphi 0, %s94
      %s98 = sphi 0, %s97
      %s114 = sphi 0, %s98
    $region4: #{tpu_custom_call.1} parent=1 // loop_header_branch
      %19 = sbr.rel (%p17) target = $region8
    $region5: #{tpu_custom_call.1} parent=1 // loop_body
      %s21 = ssub.s32 %s16, 1
      %s22 = ssub.s32 %s16, 2
      %s23 = sadd.s32 %s16, 1
      %s24 = ssub.s32 %s16, %s23
      %p25 = scmp.eq.s32.totalorder %s24, 0
      %s27 = sadd.s32 %s26, 1
      %s28 = scalar_select %p25, %s26, %s27
      %p31 = pneg %p25
      %p32 = scmp.eq.s32.totalorder %s16, 1
      %p33 = por %p31, %p32
      %p34 = scmp.ne.s32.totalorder %s26, %s29
      %p35 = scmp.eq.s32.totalorder %s16, 0
      %p36 = por %p34, %p35
      %p37 = scmp.ne.s32.totalorder %s26, %s29
      %p38 = scmp.eq.s32.totalorder %s21, 1
      %p39 = por %p37, %p38
      %p40 = scmp.ne.s32.totalorder %s29, %s30
      %p41 = scmp.eq.s32.totalorder %s21, 0
      %p42 = por %p40, %p41
      %p43 = scmp.ne.s32.totalorder %s29, %s30
      %p44 = scmp.eq.s32.totalorder %s22, 1
      %p45 = por %p43, %p44
      %p47 = scmp.ne.s32.totalorder %s30, %s46
      %p48 = scmp.eq.s32.totalorder %s22, 0
      %p49 = por %p47, %p48
      %s51 = sadd.s32 %s50, 1
      %p54 = scmp.eq.s32.totalorder %s16, 1
      %p55 = scmp.ne.s32.totalorder %s50, %s52
      %p56 = scmp.eq.s32.totalorder %s16, 0
      %p57 = por %p55, %p56
      %p58 = scmp.ne.s32.totalorder %s50, %s52
      %p59 = scmp.eq.s32.totalorder %s21, 1
      %p60 = por %p58, %p59
      %p61 = scmp.ne.s32.totalorder %s52, %s53
      %p62 = scmp.eq.s32.totalorder %s21, 0
      %p63 = por %p61, %p62
      %p64 = scmp.ne.s32.totalorder %s52, %s53
      %p65 = scmp.eq.s32.totalorder %s22, 1
      %p66 = por %p64, %p65
      %p68 = scmp.ne.s32.totalorder %s53, %s67
      %p69 = scmp.eq.s32.totalorder %s22, 0
      %p70 = por %p68, %p69
      %s72 = sadd.s32 %s71, 1
      %p75 = scmp.eq.s32.totalorder %s16, 1
      %p76 = scmp.ne.s32.totalorder %s71, %s73
      %p77 = scmp.eq.s32.totalorder %s16, 0
      %p78 = por %p76, %p77
      %p79 = scmp.ne.s32.totalorder %s71, %s73
      %p80 = scmp.eq.s32.totalorder %s21, 1
      %p81 = por %p79, %p80
      %p82 = scmp.ne.s32.totalorder %s73, %s74
      %p83 = scmp.eq.s32.totalorder %s21, 0
      %p84 = por %p82, %p83
      %p85 = scmp.ne.s32.totalorder %s73, %s74
      %p86 = scmp.eq.s32.totalorder %s22, 1
      %p87 = por %p85, %p86
      %p89 = scmp.ne.s32.totalorder %s74, %s88
      %p90 = scmp.eq.s32.totalorder %s22, 0
      %p91 = por %p89, %p90
      %s92 = ssub.s32 %s16, %s23
      %p93 = scmp.eq.s32.totalorder %s92, 0
      %s95 = sadd.s32 %s94, 1
      %s96 = scalar_select %p93, %s94, %s95
      %p99 = pneg %p93
      %p100 = scmp.eq.s32.totalorder %s16, 1
      %p101 = por %p99, %p100
      %p102 = scmp.ne.s32.totalorder %s94, %s97
      %p103 = scmp.eq.s32.totalorder %s16, 0
      %p104 = por %p102, %p103
      %p105 = scmp.ne.s32.totalorder %s94, %s97
      %p106 = scmp.eq.s32.totalorder %s21, 1
      %p107 = por %p105, %p106
      %p108 = scmp.ne.s32.totalorder %s97, %s98
      %p109 = scmp.eq.s32.totalorder %s21, 0
      %p110 = por %p108, %p109
      %p111 = scmp.ne.s32.totalorder %s97, %s98
      %p112 = scmp.eq.s32.totalorder %s22, 1
      %p113 = por %p111, %p112
      %p115 = scmp.ne.s32.totalorder %s98, %s114
      %p116 = scmp.eq.s32.totalorder %s22, 0
      %p117 = por %p115, %p116
      %p118 = scmp.le.s32.totalorder 1, %s16
      %p119 = scmp.lt.s32.totalorder %s16, 3
      %p120 = pnand %p118, %p119
      %p121 = pneg %p120
      // Predicated region
      $region9: #{tpu_custom_call.1} parent=5 // pred_check
        _
      $region10: #{tpu_custom_call.1} parent=5 // pred_check_branch
        %123 = sbr.rel (%p120) target = $region12
      $region11: #{tpu_custom_call.1} parent=5 // pred_region
        %s124 = ssub.s32 %s16, 1
        // Predicated region
        $region13: #{tpu_custom_call.1} parent=11 // pred_check
          %p125 = pneg %p63
        $region14: #{tpu_custom_call.1} parent=11 // pred_check_branch
          %127 = sbr.rel (%p125) target = $region16
        $region15: #{tpu_custom_call.1} parent=11 // pred_region
          %s129 = ssub.s32 3072, 3072
          %130 = vsyncadd [#allocation6], %s129
          %s131 = sshll.u32 [#allocation5], 4
          %s132 = int_to_ptr.vmem [resolvable:$true] %s131
          %137 = dma.hbm_to_vmem [thread:$0]  %s1, 3072, %s132, [#allocation6], 64, 64, 4
        $region16: #{tpu_custom_call.1} parent=11 // pred_fallthru
          _
        // Predicated region
        $region17: #{tpu_custom_call.1} parent=11 // pred_check
          %p138 = pneg %p84
        $region18: #{tpu_custom_call.1} parent=11 // pred_check_branch
          %140 = sbr.rel (%p138) target = $region20
        $region19: #{tpu_custom_call.1} parent=11 // pred_region
          _
        $region20: #{tpu_custom_call.1} parent=11 // pred_fallthru
          _
      $region12: #{tpu_custom_call.1} parent=5 // pred_fallthru
        _
      %p141 = scmp.lt.s32.totalorder %s16, 2
      // Predicated region
      $region21: #{tpu_custom_call.1} parent=5 // pred_check
        %p142 = pneg %p141
      $region22: #{tpu_custom_call.1} parent=5 // pred_check_branch
        %144 = sbr.rel (%p142) target = $region24
      $region23: #{tpu_custom_call.1} parent=5 // pred_region
        // Predicated region
        $region25: #{tpu_custom_call.1} parent=23 // pred_check
          %p145 = pneg %p36
        $region26: #{tpu_custom_call.1} parent=23 // pred_check_branch
          %147 = sbr.rel (%p145) target = $region28
        $region27: #{tpu_custom_call.1} parent=23 // pred_region
          %s148 = sand.u32 %s26, 1
          %s149 = scalar_lea.sflag [#allocation3], %s148
          %s150 = sand.u32 %s26, 1
          %s151 = smul.addr %s150, 64
          %s152 = scalar_lea.vmem [#allocation2], %s151
          %s153 = smul.u32 16, %s16
          %s155 = ssub.s32 1024, 1024
          %156 = vsyncadd %s149, %s155
          %s157 = smul.addr %s153, 64
          %s158 = scalar_lea.hbm %s0, %s157
          %s159 = sshll.u32 %s152, 4
          %s160 = int_to_ptr.vmem [resolvable:$true] %s159
          %165 = dma.hbm_to_vmem [thread:$0]  %s158, 1024, %s160, %s149, 64, 64, 4
        $region28: #{tpu_custom_call.1} parent=23 // pred_fallthru
          _
      $region24: #{tpu_custom_call.1} parent=5 // pred_fallthru
        _
      %p166 = scmp.le.s32.totalorder 1, %s16
      %p167 = scmp.lt.s32.totalorder %s16, 3
      %p168 = pnand %p166, %p167
      %p169 = pneg %p168
      // Predicated region
      $region29: #{tpu_custom_call.1} parent=5 // pred_check
        _
      $region30: #{tpu_custom_call.1} parent=5 // pred_check_branch
        %171 = sbr.rel (%p168) target = $region32
      $region31: #{tpu_custom_call.1} parent=5 // pred_region
        %s172 = ssub.s32 %s16, 1
        %s173 = sand.u32 %s29, 1
        %s174 = scalar_lea.sflag [#allocation3], %s173
        %s175 = sand.u32 %s29, 1
        %s176 = smul.addr %s175, 64
        %s177 = scalar_lea.vmem [#allocation2], %s176
        // Predicated region
        $region33: #{tpu_custom_call.1} parent=31 // pred_check
          %p178 = pneg %p42
        $region34: #{tpu_custom_call.1} parent=31 // pred_check_branch
          %180 = sbr.rel (%p178) target = $region36
        $region35: #{tpu_custom_call.1} parent=31 // pred_region
          %181 = dma.done %s174, 1024
        $region36: #{tpu_custom_call.1} parent=31 // pred_fallthru
          _
        // Predicated region
        $region37: #{tpu_custom_call.1} parent=31 // pred_check
          %p182 = pneg %p63
        $region38: #{tpu_custom_call.1} parent=31 // pred_check_branch
          %184 = sbr.rel (%p182) target = $region40
        $region39: #{tpu_custom_call.1} parent=31 // pred_region
          %185 = dma.done [#allocation6], 3072
        $region40: #{tpu_custom_call.1} parent=31 // pred_fallthru
          _
        %s186 = sand.u32 %s29, 1
        %s187 = scalar_lea.sflag [#allocation3], %s186
        %s188 = sand.u32 %s29, 1
        %s189 = smul.addr %s188, 64
        %s190 = scalar_lea.vmem [#allocation2], %s189
        %p191 = pneg %p42
        %p192 = pneg %p39
        %p193 = pneg %p63
        %p194 = pneg %p60
        %p195 = pneg %p84
        %p196 = pneg %p81
        %p197 = pneg %p110
        %p198 = pneg %p107
        %s199 = sand.u32 %s97, 1
        %s200 = scalar_lea.sflag [#allocation4], %s199
        %s201 = sand.u32 %s97, 1
        %s202 = smul.addr %s201, 128
        %s203 = scalar_lea.vmem [#allocation7], %s202
        %s204 = smul.u32 16, %s21
        %s205 = smul.u32 16, %s21
        %v207 = vld [vmem:[%s177] sm:$0xf]
        %v208 = vld [vmem:[%s177 + $0x4] sm:$0xf]
        %v209 = vld [vmem:[%s177 + $0x8] sm:$0xf]
        %v210 = vld [vmem:[%s177 + $0xc] sm:$0xf]
        %v211 = vld [vmem:[%s177 + $0x10] sm:$0xf]
        %v212 = vld [vmem:[%s177 + $0x14] sm:$0xf]
        %v213 = vld [vmem:[%s177 + $0x18] sm:$0xf]
        %v214 = vld [vmem:[%s177 + $0x1c] sm:$0xf]
        %v215 = vld [vmem:[%s177 + $0x20] sm:$0xf]
        %v216 = vld [vmem:[%s177 + $0x24] sm:$0xf]
        %v217 = vld [vmem:[%s177 + $0x28] sm:$0xf]
        %v218 = vld [vmem:[%s177 + $0x2c] sm:$0xf]
        %v219 = vld [vmem:[%s177 + $0x30] sm:$0xf]
        %v220 = vld [vmem:[%s177 + $0x34] sm:$0xf]
        %v221 = vld [vmem:[%s177 + $0x38] sm:$0xf]
        %v222 = vld [vmem:[%s177 + $0x3c] sm:$0xf]
        %v223 = vld [vmem:[#allocation5] sm:$0xf]
        %v224 = vld [vmem:[#allocation5 + $0x4] sm:$0xf]
        %v225 = vld [vmem:[#allocation5 + $0x8] sm:$0xf]
        %v226 = vld [vmem:[#allocation5 + $0xc] sm:$0xf]
        %v227 = vld [vmem:[#allocation5 + $0x10] sm:$0xf]
        %v228 = vld [vmem:[#allocation5 + $0x14] sm:$0xf]
        %v229 = vld [vmem:[#allocation5 + $0x18] sm:$0xf]
        %v230 = vld [vmem:[#allocation5 + $0x1c] sm:$0xf]
        %v231 = vld [vmem:[#allocation5 + $0x20] sm:$0xf]
        %v232 = vld [vmem:[#allocation5 + $0x24] sm:$0xf]
        %v233 = vld [vmem:[#allocation5 + $0x28] sm:$0xf]
        %v234 = vld [vmem:[#allocation5 + $0x2c] sm:$0xf]
        %v235 = vld [vmem:[#allocation5 + $0x30] sm:$0xf]
        %v236 = vld [vmem:[#allocation5 + $0x34] sm:$0xf]
        %v237 = vld [vmem:[#allocation5 + $0x38] sm:$0xf]
        %v238 = vld [vmem:[#allocation5 + $0x3c] sm:$0xf]
        %v239 = vld [vmem:[%s2] sm:$0x1]
        %v241 = vlaneseq
        %v242 = vshrl.u32 %v241, 7
        %v243 = vsub.s32 0, %v242
        %v244 = vrot.slane %v239, %v243
        %v262 = vunpack.c.l.b16 %v207
        %v263 = vunpack.c.l.b16 %v208
        %v264 = vunpack.c.l.b16 %v209
        %v265 = vunpack.c.l.b16 %v210
        %v266 = vunpack.c.l.b16 %v211
        %v267 = vunpack.c.l.b16 %v212
        %v268 = vunpack.c.l.b16 %v213
        %v269 = vunpack.c.l.b16 %v214
        %v270 = vunpack.c.l.b16 %v215
        %v271 = vunpack.c.l.b16 %v216
        %v272 = vunpack.c.l.b16 %v217
        %v273 = vunpack.c.l.b16 %v218
        %v274 = vunpack.c.l.b16 %v219
        %v275 = vunpack.c.l.b16 %v220
        %v276 = vunpack.c.l.b16 %v221
        %v277 = vunpack.c.l.b16 %v222
        %v278 = vpack.c.b16 %v263, %v262
        %v279 = vpack.c.b16 %v265, %v264
        %v280 = vpack.c.b16 %v267, %v266
        %v281 = vpack.c.b16 %v269, %v268
        %v282 = vpack.c.b16 %v271, %v270
        %v283 = vpack.c.b16 %v273, %v272
        %v284 = vpack.c.b16 %v275, %v274
        %v285 = vpack.c.b16 %v277, %v276
        %v310 = vunpack.c.l.b16 %v223
        %v311 = vunpack.c.l.b16 %v224
        %v312 = vunpack.c.l.b16 %v225
        %v313 = vunpack.c.l.b16 %v226
        %v314 = vunpack.c.l.b16 %v227
        %v315 = vunpack.c.l.b16 %v228
        %v316 = vunpack.c.l.b16 %v229
        %v317 = vunpack.c.l.b16 %v230
        %v318 = vunpack.c.l.b16 %v231
        %v319 = vunpack.c.l.b16 %v232
        %v320 = vunpack.c.l.b16 %v233
        %v321 = vunpack.c.l.b16 %v234
        %v322 = vunpack.c.l.b16 %v235
        %v323 = vunpack.c.l.b16 %v236
        %v324 = vunpack.c.l.b16 %v237
        %v325 = vunpack.c.l.b16 %v238
        %v326 = vpack.c.b16 %v311, %v310
        %v327 = vpack.c.b16 %v313, %v312
        %v328 = vpack.c.b16 %v315, %v314
        %v329 = vpack.c.b16 %v317, %v316
        %v330 = vpack.c.b16 %v319, %v318
        %v331 = vpack.c.b16 %v321, %v320
        %v332 = vpack.c.b16 %v323, %v322
        %v333 = vpack.c.b16 %v325, %v324
        %342 = vmatprep.subr.bf16.mxu0 0
        %343 = vmatpush1.bf16.msra.mxu0 %v326
        %344 = vmatprep.subr.bf16.mxu0 0
        %345 = vmatpush1.bf16.msra.mxu0 %v327
        %346 = vmatprep.subr.bf16.mxu0 0
        %347 = vmatpush1.bf16.msra.mxu0 %v328
        %348 = vmatprep.subr.bf16.mxu0 0
        %349 = vmatpush1.bf16.msra.mxu0 %v329
        %350 = vmatprep.subr.bf16.mxu0 0
        %351 = vmatpush1.bf16.msra.mxu0 %v330
        %352 = vmatprep.subr.bf16.mxu0 0
        %353 = vmatpush1.bf16.msra.mxu0 %v331
        %354 = vmatprep.subr.bf16.mxu0 0
        %355 = vmatpush1.bf16.msra.mxu0 %v332
        %356 = vmatprep.subr.bf16.mxu0 0
        %357 = vmatpush1.bf16.msra.mxu0 %v333
        %358 = vmatprep.subr.bf16.mxu0 0
        %359 = vmatpush1.bf16.msra.mxu0 0
        %360 = vmatprep.subr.bf16.mxu0 0
        %361 = vmatpush1.bf16.msra.mxu0 0
        %362 = vmatprep.subr.bf16.mxu0 0
        %363 = vmatpush1.bf16.msra.mxu0 0
        %364 = vmatprep.subr.bf16.mxu0 0
        %365 = vmatpush1.bf16.msra.mxu0 0
        %366 = vmatprep.subr.bf16.mxu0 0
        %367 = vmatpush1.bf16.msra.mxu0 0
        %368 = vmatprep.subr.bf16.mxu0 0
        %369 = vmatpush1.bf16.msra.mxu0 0
        %370 = vmatprep.subr.bf16.mxu0 0
        %371 = vmatpush1.bf16.msra.mxu0 0
        %372 = vmatprep.subr.bf16.mxu0 0
        %373 = vmatpush1.bf16.msra.mxu0 0
        %374 = vmatprep.mubr.bf16.mxu0 0
        %375 = vmatmul.mubr.bf16.gmra.mrb[0].mxu0 %v278
        %v376 = vpop.f32.mrb[0].mxu0
        %v377 = vadd.f32 %v244, %v376
        %v378 = vpop.f32.mrb[0].mxu0
        %v379 = vpop.f32.mrb[0].mxu0
        %v380 = vadd.f32 %v244, %v379
        %v381 = vpop.f32.mrb[0].mxu0
        %382 = vmatprep.mubr.bf16.mxu0 0
        %383 = vmatmul.mubr.bf16.gmra.mrb[0].mxu0 %v279
        %v384 = vpop.f32.mrb[0].mxu0
        %v385 = vadd.f32 %v244, %v384
        %v386 = vpop.f32.mrb[0].mxu0
        %v387 = vpop.f32.mrb[0].mxu0
        %v388 = vadd.f32 %v244, %v387
        %v389 = vpop.f32.mrb[0].mxu0
        %390 = vmatprep.mubr.bf16.mxu0 0
        %391 = vmatmul.mubr.bf16.gmra.mrb[0].mxu0 %v280
        %v392 = vpop.f32.mrb[0].mxu0
        %v393 = vadd.f32 %v244, %v392
        %v394 = vpop.f32.mrb[0].mxu0
        %v395 = vpop.f32.mrb[0].mxu0
        %v396 = vadd.f32 %v244, %v395
        %v397 = vpop.f32.mrb[0].mxu0
        %398 = vmatprep.mubr.bf16.mxu0 0
        %399 = vmatmul.mubr.bf16.gmra.mrb[0].mxu0 %v281
        %v400 = vpop.f32.mrb[0].mxu0
        %v401 = vadd.f32 %v244, %v400
        %v402 = vpop.f32.mrb[0].mxu0
        %v403 = vpop.f32.mrb[0].mxu0
        %v404 = vadd.f32 %v244, %v403
        %v405 = vpop.f32.mrb[0].mxu0
        %406 = vmatprep.mubr.bf16.mxu0 0
        %407 = vmatmul.mubr.bf16.gmra.mrb[0].mxu0 %v282
        %v408 = vpop.f32.mrb[0].mxu0
        %v409 = vadd.f32 %v244, %v408
        %v410 = vpop.f32.mrb[0].mxu0
        %v411 = vpop.f32.mrb[0].mxu0
        %v412 = vadd.f32 %v244, %v411
        %v413 = vpop.f32.mrb[0].mxu0
        %414 = vmatprep.mubr.bf16.mxu0 0
        %415 = vmatmul.mubr.bf16.gmra.mrb[0].mxu0 %v283
        %v416 = vpop.f32.mrb[0].mxu0
        %v417 = vadd.f32 %v244, %v416
        %v418 = vpop.f32.mrb[0].mxu0
        %v419 = vpop.f32.mrb[0].mxu0
        %v420 = vadd.f32 %v244, %v419
        %v421 = vpop.f32.mrb[0].mxu0
        %422 = vmatprep.mubr.bf16.mxu0 0
        %423 = vmatmul.mubr.bf16.gmra.mrb[0].mxu0 %v284
        %v424 = vpop.f32.mrb[0].mxu0
        %v425 = vadd.f32 %v244, %v424
        %v426 = vpop.f32.mrb[0].mxu0
        %v427 = vpop.f32.mrb[0].mxu0
        %v428 = vadd.f32 %v244, %v427
        %v429 = vpop.f32.mrb[0].mxu0
        %430 = vmatprep.mubr.bf16.mxu0 0
        %431 = vmatmul.mubr.bf16.gmra.mrb[0].mxu0 %v285
        %v432 = vpop.f32.mrb[0].mxu0
        %v433 = vadd.f32 %v244, %v432
        %v434 = vpop.f32.mrb[0].mxu0
        %v435 = vpop.f32.mrb[0].mxu0
        %v436 = vadd.f32 %v244, %v435
        %v437 = vpop.f32.mrb[0].mxu0
        %438 = vdwg.mxu0
        %v439 = vmax.f32 %v377, 0.0
        %v440 = vmax.f32 %v380, 0.0
        %v441 = vmax.f32 %v385, 0.0
        %v442 = vmax.f32 %v388, 0.0
        %v443 = vmax.f32 %v393, 0.0
        %v444 = vmax.f32 %v396, 0.0
        %v445 = vmax.f32 %v401, 0.0
        %v446 = vmax.f32 %v404, 0.0
        %v447 = vmax.f32 %v409, 0.0
        %v448 = vmax.f32 %v412, 0.0
        %v449 = vmax.f32 %v417, 0.0
        %v450 = vmax.f32 %v420, 0.0
        %v451 = vmax.f32 %v425, 0.0
        %v452 = vmax.f32 %v428, 0.0
        %v453 = vmax.f32 %v433, 0.0
        %v454 = vmax.f32 %v436, 0.0
        %v455 = vpack.c.bf16 %v440, %v439
        %v456 = vpack.c.bf16 %v442, %v441
        %v457 = vpack.c.bf16 %v444, %v443
        %v458 = vpack.c.bf16 %v446, %v445
        %v459 = vpack.c.bf16 %v448, %v447
        %v460 = vpack.c.bf16 %v450, %v449
        %v461 = vpack.c.bf16 %v452, %v451
        %v462 = vpack.c.bf16 %v454, %v453
        %s463 = scalar_lea.vmem [#allocation5], 64
        %v464 = vld [vmem:[%s463] sm:$0xf]
        %v465 = vld [vmem:[%s463 + $0x4] sm:$0xf]
        %v466 = vld [vmem:[%s463 + $0x8] sm:$0xf]
        %v467 = vld [vmem:[%s463 + $0xc] sm:$0xf]
        %v468 = vld [vmem:[%s463 + $0x10] sm:$0xf]
        %v469 = vld [vmem:[%s463 + $0x14] sm:$0xf]
        %v470 = vld [vmem:[%s463 + $0x18] sm:$0xf]
        %v471 = vld [vmem:[%s463 + $0x1c] sm:$0xf]
        %v472 = vld [vmem:[%s463 + $0x20] sm:$0xf]
        %v473 = vld [vmem:[%s463 + $0x24] sm:$0xf]
        %v474 = vld [vmem:[%s463 + $0x28] sm:$0xf]
        %v475 = vld [vmem:[%s463 + $0x2c] sm:$0xf]
        %v476 = vld [vmem:[%s463 + $0x30] sm:$0xf]
        %v477 = vld [vmem:[%s463 + $0x34] sm:$0xf]
        %v478 = vld [vmem:[%s463 + $0x38] sm:$0xf]
        %v479 = vld [vmem:[%s463 + $0x3c] sm:$0xf]
        %s480 = scalar_lea.vmem %s2, 1
        %v481 = vld [vmem:[%s480] sm:$0x1]
        %v483 = vlaneseq
        %v484 = vshrl.u32 %v483, 7
        %v485 = vsub.s32 0, %v484
        %v486 = vrot.slane %v481, %v485
        %v504 = vunpack.c.l.b16 %v464
        %v505 = vunpack.c.l.b16 %v465
        %v506 = vunpack.c.l.b16 %v466
        %v507 = vunpack.c.l.b16 %v467
        %v508 = vunpack.c.l.b16 %v468
        %v509 = vunpack.c.l.b16 %v469
        %v510 = vunpack.c.l.b16 %v470
        %v511 = vunpack.c.l.b16 %v471
        %v512 = vunpack.c.l.b16 %v472
        %v513 = vunpack.c.l.b16 %v473
        %v514 = vunpack.c.l.b16 %v474
        %v515 = vunpack.c.l.b16 %v475
        %v516 = vunpack.c.l.b16 %v476
        %v517 = vunpack.c.l.b16 %v477
        %v518 = vunpack.c.l.b16 %v478
        %v519 = vunpack.c.l.b16 %v479
        %v520 = vpack.c.b16 %v505, %v504
        %v521 = vpack.c.b16 %v507, %v506
        %v522 = vpack.c.b16 %v509, %v508
        %v523 = vpack.c.b16 %v511, %v510
        %v524 = vpack.c.b16 %v513, %v512
        %v525 = vpack.c.b16 %v515, %v514
        %v526 = vpack.c.b16 %v517, %v516
        %v527 = vpack.c.b16 %v519, %v518
        %536 = vmatprep.subr.bf16.mxu0 0
        %537 = vmatpush1.bf16.msra.mxu0 %v520
        %538 = vmatprep.subr.bf16.mxu0 0
        %539 = vmatpush1.bf16.msra.mxu0 %v521
        %540 = vmatprep.subr.bf16.mxu0 0
        %541 = vmatpush1.bf16.msra.mxu0 %v522
        %542 = vmatprep.subr.bf16.mxu0 0
        %543 = vmatpush1.bf16.msra.mxu0 %v523
        %544 = vmatprep.subr.bf16.mxu0 0
        %545 = vmatpush1.bf16.msra.mxu0 %v524
        %546 = vmatprep.subr.bf16.mxu0 0
        %547 = vmatpush1.bf16.msra.mxu0 %v525
        %548 = vmatprep.subr.bf16.mxu0 0
        %549 = vmatpush1.bf16.msra.mxu0 %v526
        %550 = vmatprep.subr.bf16.mxu0 0
        %551 = vmatpush1.bf16.msra.mxu0 %v527
        %552 = vmatprep.subr.bf16.mxu0 0
        %553 = vmatpush1.bf16.msra.mxu0 0
        %554 = vmatprep.subr.bf16.mxu0 0
        %555 = vmatpush1.bf16.msra.mxu0 0
        %556 = vmatprep.subr.bf16.mxu0 0
        %557 = vmatpush1.bf16.msra.mxu0 0
        %558 = vmatprep.subr.bf16.mxu0 0
        %559 = vmatpush1.bf16.msra.mxu0 0
        %560 = vmatprep.subr.bf16.mxu0 0
        %561 = vmatpush1.bf16.msra.mxu0 0
        %562 = vmatprep.subr.bf16.mxu0 0
        %563 = vmatpush1.bf16.msra.mxu0 0
        %564 = vmatprep.subr.bf16.mxu0 0
        %565 = vmatpush1.bf16.msra.mxu0 0
        %566 = vmatprep.subr.bf16.mxu0 0
        %567 = vmatpush1.bf16.msra.mxu0 0
        %568 = vmatprep.mubr.bf16.mxu0 0
        %569 = vmatmul.mubr.bf16.gmra.mrb[0].mxu0 %v455
        %v570 = vpop.f32.mrb[0].mxu0
        %v571 = vadd.f32 %v486, %v570
        %v572 = vpop.f32.mrb[0].mxu0
        %v573 = vpop.f32.mrb[0].mxu0
        %v574 = vadd.f32 %v486, %v573
        %v575 = vpop.f32.mrb[0].mxu0
        %576 = vmatprep.mubr.bf16.mxu0 0
        %577 = vmatmul.mubr.bf16.gmra.mrb[0].mxu0 %v456
        %v578 = vpop.f32.mrb[0].mxu0
        %v579 = vadd.f32 %v486, %v578
        %v580 = vpop.f32.mrb[0].mxu0
        %v581 = vpop.f32.mrb[0].mxu0
        %v582 = vadd.f32 %v486, %v581
        %v583 = vpop.f32.mrb[0].mxu0
        %584 = vmatprep.mubr.bf16.mxu0 0
        %585 = vmatmul.mubr.bf16.gmra.mrb[0].mxu0 %v457
        %v586 = vpop.f32.mrb[0].mxu0
        %v587 = vadd.f32 %v486, %v586
        %v588 = vpop.f32.mrb[0].mxu0
        %v589 = vpop.f32.mrb[0].mxu0
        %v590 = vadd.f32 %v486, %v589
        %v591 = vpop.f32.mrb[0].mxu0
        %592 = vmatprep.mubr.bf16.mxu0 0
        %593 = vmatmul.mubr.bf16.gmra.mrb[0].mxu0 %v458
        %v594 = vpop.f32.mrb[0].mxu0
        %v595 = vadd.f32 %v486, %v594
        %v596 = vpop.f32.mrb[0].mxu0
        %v597 = vpop.f32.mrb[0].mxu0
        %v598 = vadd.f32 %v486, %v597
        %v599 = vpop.f32.mrb[0].mxu0
        %600 = vmatprep.mubr.bf16.mxu0 0
        %601 = vmatmul.mubr.bf16.gmra.mrb[0].mxu0 %v459
        %v602 = vpop.f32.mrb[0].mxu0
        %v603 = vadd.f32 %v486, %v602
        %v604 = vpop.f32.mrb[0].mxu0
        %v605 = vpop.f32.mrb[0].mxu0
        %v606 = vadd.f32 %v486, %v605
        %v607 = vpop.f32.mrb[0].mxu0
        %608 = vmatprep.mubr.bf16.mxu0 0
        %609 = vmatmul.mubr.bf16.gmra.mrb[0].mxu0 %v460
        %v610 = vpop.f32.mrb[0].mxu0
        %v611 = vadd.f32 %v486, %v610
        %v612 = vpop.f32.mrb[0].mxu0
        %v613 = vpop.f32.mrb[0].mxu0
        %v614 = vadd.f32 %v486, %v613
        %v615 = vpop.f32.mrb[0].mxu0
        %616 = vmatprep.mubr.bf16.mxu0 0
        %617 = vmatmul.mubr.bf16.gmra.mrb[0].mxu0 %v461
        %v618 = vpop.f32.mrb[0].mxu0
        %v619 = vadd.f32 %v486, %v618
        %v620 = vpop.f32.mrb[0].mxu0
        %v621 = vpop.f32.mrb[0].mxu0
        %v622 = vadd.f32 %v486, %v621
        %v623 = vpop.f32.mrb[0].mxu0
        %624 = vmatprep.mubr.bf16.mxu0 0
        %625 = vmatmul.mubr.bf16.gmra.mrb[0].mxu0 %v462
        %v626 = vpop.f32.mrb[0].mxu0
        %v627 = vadd.f32 %v486, %v626
        %v628 = vpop.f32.mrb[0].mxu0
        %v629 = vpop.f32.mrb[0].mxu0
        %v630 = vadd.f32 %v486, %v629
        %v631 = vpop.f32.mrb[0].mxu0
        %632 = vdwg.mxu0
        %v633 = vmax.f32 %v571, 0.0
        %v634 = vmax.f32 %v574, 0.0
        %v635 = vmax.f32 %v579, 0.0
        %v636 = vmax.f32 %v582, 0.0
        %v637 = vmax.f32 %v587, 0.0
        %v638 = vmax.f32 %v590, 0.0
        %v639 = vmax.f32 %v595, 0.0
        %v640 = vmax.f32 %v598, 0.0
        %v641 = vmax.f32 %v603, 0.0
        %v642 = vmax.f32 %v606, 0.0
        %v643 = vmax.f32 %v611, 0.0
        %v644 = vmax.f32 %v614, 0.0
        %v645 = vmax.f32 %v619, 0.0
        %v646 = vmax.f32 %v622, 0.0
        %v647 = vmax.f32 %v627, 0.0
        %v648 = vmax.f32 %v630, 0.0
        %v649 = vpack.c.bf16 %v634, %v633
        %v650 = vpack.c.bf16 %v636, %v635
        %v651 = vpack.c.bf16 %v638, %v637
        %v652 = vpack.c.bf16 %v640, %v639
        %v653 = vpack.c.bf16 %v642, %v641
        %v654 = vpack.c.bf16 %v644, %v643
        %v655 = vpack.c.bf16 %v646, %v645
        %v656 = vpack.c.bf16 %v648, %v647
        %s657 = scalar_lea.vmem [#allocation5], 128
        %v658 = vld [vmem:[%s657] sm:$0xf]
        %v659 = vld [vmem:[%s657 + $0x4] sm:$0xf]
        %v660 = vld [vmem:[%s657 + $0x8] sm:$0xf]
        %v661 = vld [vmem:[%s657 + $0xc] sm:$0xf]
        %v662 = vld [vmem:[%s657 + $0x10] sm:$0xf]
        %v663 = vld [vmem:[%s657 + $0x14] sm:$0xf]
        %v664 = vld [vmem:[%s657 + $0x18] sm:$0xf]
        %v665 = vld [vmem:[%s657 + $0x1c] sm:$0xf]
        %v666 = vld [vmem:[%s657 + $0x20] sm:$0xf]
        %v667 = vld [vmem:[%s657 + $0x24] sm:$0xf]
        %v668 = vld [vmem:[%s657 + $0x28] sm:$0xf]
        %v669 = vld [vmem:[%s657 + $0x2c] sm:$0xf]
        %v670 = vld [vmem:[%s657 + $0x30] sm:$0xf]
        %v671 = vld [vmem:[%s657 + $0x34] sm:$0xf]
        %v672 = vld [vmem:[%s657 + $0x38] sm:$0xf]
        %v673 = vld [vmem:[%s657 + $0x3c] sm:$0xf]
        %s674 = scalar_lea.vmem %s2, 2
        %v675 = vld [vmem:[%s674] sm:$0x1]
        %v677 = vlaneseq
        %v678 = vshrl.u32 %v677, 7
        %v679 = vsub.s32 0, %v678
        %v680 = vrot.slane %v675, %v679
        %v698 = vunpack.c.l.b16 %v658
        %v699 = vunpack.c.l.b16 %v659
        %v700 = vunpack.c.l.b16 %v660
        %v701 = vunpack.c.l.b16 %v661
        %v702 = vunpack.c.l.b16 %v662
        %v703 = vunpack.c.l.b16 %v663
        %v704 = vunpack.c.l.b16 %v664
        %v705 = vunpack.c.l.b16 %v665
        %v706 = vunpack.c.l.b16 %v666
        %v707 = vunpack.c.l.b16 %v667
        %v708 = vunpack.c.l.b16 %v668
        %v709 = vunpack.c.l.b16 %v669
        %v710 = vunpack.c.l.b16 %v670
        %v711 = vunpack.c.l.b16 %v671
        %v712 = vunpack.c.l.b16 %v672
        %v713 = vunpack.c.l.b16 %v673
        %v714 = vpack.c.b16 %v699, %v698
        %v715 = vpack.c.b16 %v701, %v700
        %v716 = vpack.c.b16 %v703, %v702
        %v717 = vpack.c.b16 %v705, %v704
        %v718 = vpack.c.b16 %v707, %v706
        %v719 = vpack.c.b16 %v709, %v708
        %v720 = vpack.c.b16 %v711, %v710
        %v721 = vpack.c.b16 %v713, %v712
        %730 = vmatprep.subr.bf16.mxu0 0
        %731 = vmatpush1.bf16.msra.mxu0 %v714
        %732 = vmatprep.subr.bf16.mxu0 0
        %733 = vmatpush1.bf16.msra.mxu0 %v715
        %734 = vmatprep.subr.bf16.mxu0 0
        %735 = vmatpush1.bf16.msra.mxu0 %v716
        %736 = vmatprep.subr.bf16.mxu0 0
        %737 = vmatpush1.bf16.msra.mxu0 %v717
        %738 = vmatprep.subr.bf16.mxu0 0
        %739 = vmatpush1.bf16.msra.mxu0 %v718
        %740 = vmatprep.subr.bf16.mxu0 0
        %741 = vmatpush1.bf16.msra.mxu0 %v719
        %742 = vmatprep.subr.bf16.mxu0 0
        %743 = vmatpush1.bf16.msra.mxu0 %v720
        %744 = vmatprep.subr.bf16.mxu0 0
        %745 = vmatpush1.bf16.msra.mxu0 %v721
        %746 = vmatprep.subr.bf16.mxu0 0
        %747 = vmatpush1.bf16.msra.mxu0 0
        %748 = vmatprep.subr.bf16.mxu0 0
        %749 = vmatpush1.bf16.msra.mxu0 0
        %750 = vmatprep.subr.bf16.mxu0 0
        %751 = vmatpush1.bf16.msra.mxu0 0
        %752 = vmatprep.subr.bf16.mxu0 0
        %753 = vmatpush1.bf16.msra.mxu0 0
        %754 = vmatprep.subr.bf16.mxu0 0
        %755 = vmatpush1.bf16.msra.mxu0 0
        %756 = vmatprep.subr.bf16.mxu0 0
        %757 = vmatpush1.bf16.msra.mxu0 0
        %758 = vmatprep.subr.bf16.mxu0 0
        %759 = vmatpush1.bf16.msra.mxu0 0
        %760 = vmatprep.subr.bf16.mxu0 0
        %761 = vmatpush1.bf16.msra.mxu0 0
        %762 = vmatprep.mubr.bf16.mxu0 0
        %763 = vmatmul.mubr.bf16.gmra.mrb[0].mxu0 %v649
        %v764 = vpop.f32.mrb[0].mxu0
        %v765 = vadd.f32 %v680, %v764
        %v766 = vpop.f32.mrb[0].mxu0
        %v767 = vpop.f32.mrb[0].mxu0
        %v768 = vadd.f32 %v680, %v767
        %v769 = vpop.f32.mrb[0].mxu0
        %770 = vmatprep.mubr.bf16.mxu0 0
        %771 = vmatmul.mubr.bf16.gmra.mrb[0].mxu0 %v650
        %v772 = vpop.f32.mrb[0].mxu0
        %v773 = vadd.f32 %v680, %v772
        %v774 = vpop.f32.mrb[0].mxu0
        %v775 = vpop.f32.mrb[0].mxu0
        %v776 = vadd.f32 %v680, %v775
        %v777 = vpop.f32.mrb[0].mxu0
        %778 = vmatprep.mubr.bf16.mxu0 0
        %779 = vmatmul.mubr.bf16.gmra.mrb[0].mxu0 %v651
        %v780 = vpop.f32.mrb[0].mxu0
        %v781 = vadd.f32 %v680, %v780
        %v782 = vpop.f32.mrb[0].mxu0
        %v783 = vpop.f32.mrb[0].mxu0
        %v784 = vadd.f32 %v680, %v783
        %v785 = vpop.f32.mrb[0].mxu0
        %786 = vmatprep.mubr.bf16.mxu0 0
        %787 = vmatmul.mubr.bf16.gmra.mrb[0].mxu0 %v652
        %v788 = vpop.f32.mrb[0].mxu0
        %v789 = vadd.f32 %v680, %v788
        %v790 = vpop.f32.mrb[0].mxu0
        %v791 = vpop.f32.mrb[0].mxu0
        %v792 = vadd.f32 %v680, %v791
        %v793 = vpop.f32.mrb[0].mxu0
        %794 = vmatprep.mubr.bf16.mxu0 0
        %795 = vmatmul.mubr.bf16.gmra.mrb[0].mxu0 %v653
        %v796 = vpop.f32.mrb[0].mxu0
        %v797 = vadd.f32 %v680, %v796
        %v798 = vpop.f32.mrb[0].mxu0
        %v799 = vpop.f32.mrb[0].mxu0
        %v800 = vadd.f32 %v680, %v799
        %v801 = vpop.f32.mrb[0].mxu0
        %802 = vmatprep.mubr.bf16.mxu0 0
        %803 = vmatmul.mubr.bf16.gmra.mrb[0].mxu0 %v654
        %v804 = vpop.f32.mrb[0].mxu0
        %v805 = vadd.f32 %v680, %v804
        %v806 = vpop.f32.mrb[0].mxu0
        %v807 = vpop.f32.mrb[0].mxu0
        %v808 = vadd.f32 %v680, %v807
        %v809 = vpop.f32.mrb[0].mxu0
        %810 = vmatprep.mubr.bf16.mxu0 0
        %811 = vmatmul.mubr.bf16.gmra.mrb[0].mxu0 %v655
        %v812 = vpop.f32.mrb[0].mxu0
        %v813 = vadd.f32 %v680, %v812
        %v814 = vpop.f32.mrb[0].mxu0
        %v815 = vpop.f32.mrb[0].mxu0
        %v816 = vadd.f32 %v680, %v815
        %v817 = vpop.f32.mrb[0].mxu0
        %818 = vmatprep.mubr.bf16.mxu0 0
        %819 = vmatmul.mubr.bf16.gmra.mrb[0].mxu0 %v656
        %v820 = vpop.f32.mrb[0].mxu0
        %v821 = vadd.f32 %v680, %v820
        %v822 = vpop.f32.mrb[0].mxu0
        %v823 = vpop.f32.mrb[0].mxu0
        %v824 = vadd.f32 %v680, %v823
        %v825 = vpop.f32.mrb[0].mxu0
        %826 = vdwg.mxu0
        %827 = vst [vmem:[%s203] sm:$0xff] %v765
        %828 = vst [vmem:[%s203 + $0x8] sm:$0xff] %v768
        %829 = vst [vmem:[%s203 + $0x10] sm:$0xff] %v773
        %830 = vst [vmem:[%s203 + $0x18] sm:$0xff] %v776
        %831 = vst [vmem:[%s203 + $0x20] sm:$0xff] %v781
        %832 = vst [vmem:[%s203 + $0x28] sm:$0xff] %v784
        %833 = vst [vmem:[%s203 + $0x30] sm:$0xff] %v789
        %834 = vst [vmem:[%s203 + $0x38] sm:$0xff] %v792
        %835 = vst [vmem:[%s203 + $0x40] sm:$0xff] %v797
        %836 = vst [vmem:[%s203 + $0x48] sm:$0xff] %v800
        %837 = vst [vmem:[%s203 + $0x50] sm:$0xff] %v805
        %838 = vst [vmem:[%s203 + $0x58] sm:$0xff] %v808
        %839 = vst [vmem:[%s203 + $0x60] sm:$0xff] %v813
        %840 = vst [vmem:[%s203 + $0x68] sm:$0xff] %v816
        %841 = vst [vmem:[%s203 + $0x70] sm:$0xff] %v821
        %842 = vst [vmem:[%s203 + $0x78] sm:$0xff] %v824
        %s843 = sand.u32 %s97, 1
        %s844 = scalar_lea.sflag [#allocation4], %s843
        %s845 = sand.u32 %s97, 1
        %s846 = smul.addr %s845, 128
        %s847 = scalar_lea.vmem [#allocation7], %s846
        // Predicated region
        $region41: #{tpu_custom_call.1} parent=31 // pred_check
          %p848 = pneg %p107
        $region42: #{tpu_custom_call.1} parent=31 // pred_check_branch
          %850 = sbr.rel (%p848) target = $region44
        $region43: #{tpu_custom_call.1} parent=31 // pred_region
          %s851 = smul.u32 16, %s21
          %s853 = ssub.s32 2048, 2048
          %854 = vsyncadd %s844, %s853
          %s855 = smul.addr %s851, 128
          %s856 = scalar_lea.hbm %s3, %s855
          %s857 = sshll.u32 %s847, 4
          %s858 = int_to_ptr.vmem [resolvable:$true] %s857
          %863 = dma.vmem_to_hbm [thread:$0]  %s858, 2048, %s856, %s844, 128, 128, 8
        $region44: #{tpu_custom_call.1} parent=31 // pred_fallthru
          _
      $region32: #{tpu_custom_call.1} parent=5 // pred_fallthru
        _
      %p864 = scmp.le.s32.totalorder 2, %s16
      // Predicated region
      $region45: #{tpu_custom_call.1} parent=5 // pred_check
        %p865 = pneg %p864
      $region46: #{tpu_custom_call.1} parent=5 // pred_check_branch
        %867 = sbr.rel (%p865) target = $region48
      $region47: #{tpu_custom_call.1} parent=5 // pred_region
        %s868 = ssub.s32 %s16, 2
        // Predicated region
        $region49: #{tpu_custom_call.1} parent=47 // pred_check
          %p869 = pneg %p113
        $region50: #{tpu_custom_call.1} parent=47 // pred_check_branch
          %871 = sbr.rel (%p869) target = $region52
        $region51: #{tpu_custom_call.1} parent=47 // pred_region
          %s872 = sand.u32 %s98, 1
          %s873 = scalar_lea.sflag [#allocation4], %s872
          %s874 = sand.u32 %s98, 1
          %s875 = smul.addr %s874, 128
          %s876 = scalar_lea.vmem [#allocation7], %s875
          %877 = dma.done %s873, 2048
        $region52: #{tpu_custom_call.1} parent=47 // pred_fallthru
          _
      $region48: #{tpu_custom_call.1} parent=5 // pred_fallthru
        _
    $region6: #{tpu_custom_call.1} parent=1 // loop_footer
      %s20 = sadd.s32 1, %s16
    $region7: #{tpu_custom_call.1} parent=1 // loop_footer_branch
      %15 = sbr.rel target = $region3
    $region8: #{tpu_custom_call.1} parent=1 // loop_exit
      _
    %878 = vsyncpa [#allocation3], 1
    %s879 = scalar_lea.sflag [#allocation3], 1
    %880 = vsyncpa %s879, 1
    %881 = vsyncpa [#allocation6], 1
    %882 = vsyncpa [#allocation4], 1
    %s883 = scalar_lea.sflag [#allocation4], 1
    %884 = vsyncpa %s883, 1

</llo_original>
